<compile_context>
chip_gen: v7x
topology: tpu7x:2x2x1
jax: 0.10.0
libtpu: 0.0.40
codegen_flags: <defaults>
</compile_context>

<pallas_src>
import math

import jax
import jax.numpy as jnp
from jax.experimental import pallas as pl
from jax.experimental.pallas import tpu as pltpu

_EPS = 1e-5  # torch.nn.functional.batch_norm default eps


def _round_up(x, m):
    return ((x + m - 1) // m) * m


# ----------------------------- kernels ---------------------------------------


def _adain_norm_kernel(x_ref, wb_ref, o_ref):
    # x_ref: (tn, S)   wb_ref: (tn, 2) = [weight | bias]
    x = x_ref[...].astype(jnp.float32)
    w = wb_ref[:, 0:1].astype(jnp.float32)
    b = wb_ref[:, 1:2].astype(jnp.float32)

    inv_s = jnp.float32(1.0 / x.shape[-1])
    s1 = jnp.sum(x, axis=-1, keepdims=True)            # XLU cross-lane reductions
    s2 = jnp.sum(x * x, axis=-1, keepdims=True)
    mean = s1 * inv_s
    # One-pass biased variance; clamp >= 0 against cancellation.
    var = jnp.maximum(s2 * inv_s - mean * mean, 0.0)

    # Fold normalization + affine into per-row scale/shift:
    #   out = (x - mean) * rsqrt(var+eps) * w + b  ==  x*scale + shift
    scale = jax.lax.rsqrt(var + _EPS) * w               # (tn, 1); rsqrt -> EUP slot
    shift = b - mean * scale                            # (tn, 1)
    o_ref[...] = (x * scale + shift).astype(o_ref.dtype)


def _film_kernel(x_ref, wb_ref, o_ref):
    # Trivial broadcast FMA; kept in Pallas for a single code path (XLA would also
    # hit roofline here now that the pad/slice copies are gone).
    x = x_ref[...].astype(jnp.float32)
    w = wb_ref[:, 0:1].astype(jnp.float32)
    b = wb_ref[:, 1:2].astype(jnp.float32)
    o_ref[...] = (x * w + b).astype(o_ref.dtype)


# --------------------------- sizing / dispatch --------------------------------

_TPU_BLOCK_PARAMS_CACHE = None
_DIM_SEMANTICS_CACHE = None


def _tpu_block_params():
    """Per-generation (target x-bytes moved per grid step, VMEM-limit cap)."""
    global _TPU_BLOCK_PARAMS_CACHE
    if _TPU_BLOCK_PARAMS_CACHE is None:
        try:
            vmem_phys = int(pltpu.get_tpu_info().vmem_capacity_bytes)
        except Exception:
            vmem_phys = 64 << 20                  # unknown -> assume tightest (v7x)
        if vmem_phys <= (64 << 20):               # v7x: 64 MiB/TC, 3.2 TB/s HBM
            _TPU_BLOCK_PARAMS_CACHE = (8 << 20, 48 << 20)   # leave 16 MiB headroom
        else:                                     # v5e / v6e: 128 MiB physical VMEM
            _TPU_BLOCK_PARAMS_CACHE = (4 << 20, 64 << 20)
    return _TPU_BLOCK_PARAMS_CACHE


def _dim_semantics_candidates():
    # Prefer CORE_PARALLEL so v7x's two TensorCores split the row stream; fall back
    # to plain "parallel" if this jax/libtpu build or chip rejects it.
    core_parallel = getattr(pltpu, "CORE_PARALLEL", None)
    if core_parallel is not None:
        return ((core_parallel,), ("parallel",))
    return (("parallel",),)


def _run_pallas(kernel, x2, wb, tn, vmem_limit, out_dtype):
    global _DIM_SEMANTICS_CACHE
    N, S = x2.shape
    n_blocks = pl.cdiv(N, tn)

    def call(dim_sem):
        return pl.pallas_call(
            kernel,
            out_shape=jax.ShapeDtypeStruct((N, S), out_dtype),
            grid=(n_blocks,),
            in_specs=[
                pl.BlockSpec((tn, S), lambda i: (i, 0)),
                pl.BlockSpec((tn, 2), lambda i: (i, 0)),
            ],
            out_specs=pl.BlockSpec((tn, S), lambda i: (i, 0)),
            compiler_params=pltpu.CompilerParams(
                dimension_semantics=dim_sem,
                vmem_limit_bytes=vmem_limit,
            ),
        )(x2, wb)

    if _DIM_SEMANTICS_CACHE is not None:
        return call(_DIM_SEMANTICS_CACHE)

    candidates = _dim_semantics_candidates()
    last = len(candidates) - 1
    for idx, sem in enumerate(candidates):
        try:
            out = call(sem)
            _DIM_SEMANTICS_CACHE = sem
            return out
        except Exception:
            if idx == last:
                raise


def adaptive_instance_norm_3d(x, weight, bias, *, film_layer,
                              tn=None, target_block_bytes=None,
                              vmem_cap_bytes=None):
    """x: (b, c, D, *spatial); weight/bias flatten to b*c*D elements."""
    b_, c, D = x.shape[0], x.shape[1], x.shape[2]
    spatial = x.shape[3:]
    N = b_ * c * D
    S = math.prod(spatial) if spatial else 1

    x2 = x.reshape(N, S)                      # free row-major reshape (no copy)
    # Pack weight/bias into one (N, 2) array -> a single tiny contiguous side-DMA
    # per grid step.
    wb = jnp.stack(
        [weight.reshape(N).astype(jnp.float32),
         bias.reshape(N).astype(jnp.float32)],
        axis=1,
    )

    default_target, default_cap = _tpu_block_params()
    if target_block_bytes is None:
        target_block_bytes = default_target
    if vmem_cap_bytes is None:
        vmem_cap_bytes = default_cap

    itemsize = jnp.dtype(x2.dtype).itemsize
    row_align = max(8, 32 // itemsize)        # sublane packing: 8 f32 / 16 bf16 / 32 i8
    s_lanes = _round_up(S, 128)               # lane padding of every VMEM block
    # Honest VMEM per row of tile: x in + x out (each double-buffered) plus the
    # double-buffered (tn, 2) wb block, which lane-pads to (tn, 128) f32.
    per_row_vmem = 4 * s_lanes * itemsize + 2 * 128 * 4
    headroom = 2 << 20

    if N <= row_align:
        tn = N                                # full-dim row block (exempt from 8-row rule)
    else:
        tn_fit = max(row_align,
                     ((vmem_cap_bytes - headroom) // per_row_vmem)
                     // row_align * row_align)
        if tn is None:
            tn = max(1, target_block_bytes // (S * itemsize))
        tn = max(row_align, (int(tn) // row_align) * row_align)
        # Keep the block <= N so only the last block is ragged (Pallas masks it).
        tn = min(tn, tn_fit, (N // row_align) * row_align)

    # TODO(synk): if H*W ever gets so large that even a `row_align`-row block exceeds
    # the per-generation VMEM cap (>~1.5 MiB per f32 row), add an S-tiled two-pass
    # (stats then normalize) variant; UCLordModel/Generator3D feature maps never hit it.
    vmem_limit = int(min(max(tn * per_row_vmem + headroom, 16 << 20), vmem_cap_bytes))

    kernel = _film_kernel if film_layer else _adain_norm_kernel
    out = _run_pallas(kernel, x2, wb, tn, vmem_limit, x.dtype)
    return out.reshape(x.shape)


# ------------------------------ reference -------------------------------------


def _reference(x, weight, bias, *, film_layer):
    b_, c, D = x.shape[0], x.shape[1], x.shape[2]
    N = b_ * c * D
    S = math.prod(x.shape[3:])
    x2 = x.reshape(N, S).astype(jnp.float32)
    w2 = weight.reshape(N, 1).astype(jnp.float32)
    b2 = bias.reshape(N, 1).astype(jnp.float32)
    if film_layer:
        out = x2 * w2 + b2
    else:
        m = x2.mean(-1, keepdims=True)
        v = ((x2 - m) ** 2).mean(-1, keepdims=True)
        out = ((x2 - m) / jnp.sqrt(v + _EPS)) * w2 + b2
    return out.reshape(x.shape).astype(x.dtype)


if __name__ == "__main__":
    key = jax.random.PRNGKey(0)

    # Test 1: 5D (b, c, D, H, W) input, N divisible by the row tile.
    kx, kw, kb, key = jax.random.split(key, 4)
    b_, c, D, H, W = 2, 4, 8, 16, 16
    x = jax.random.normal(kx, (b_, c, D, H, W), dtype=jnp.float32)
    weight = jax.random.normal(kw, (b_, c, D), dtype=jnp.float32)
    bias = jax.random.normal(kb, (b_, c, D), dtype=jnp.float32)

    out_norm = adaptive_instance_norm_3d(x, weight, bias, film_layer=False)
    out_film = adaptive_instance_norm_3d(x, weight, bias, film_layer=True)
    jax.block_until_ready((out_norm, out_film))

    assert jnp.allclose(out_norm, _reference(x, weight, bias, film_layer=False),
                        atol=1e-4, rtol=1e-4)
    assert jnp.allclose(out_film, _reference(x, weight, bias, film_layer=True),
                        atol=1e-5, rtol=1e-5)

    # Test 2: N = b*c*D NOT a multiple of the row tile (exercises the ragged
    # boundary block with no host-side padding) and S = H*W not a multiple of 128.
    kx2, kw2, kb2, _ = jax.random.split(key, 4)
    b2_, c2, D2, H2, W2 = 1, 3, 5, 12, 12
    x_r = jax.random.normal(kx2, (b2_, c2, D2, H2, W2), dtype=jnp.float32)
    weight_r = jax.random.normal(kw2, (b2_, c2, D2), dtype=jnp.float32)
    bias_r = jax.random.normal(kb2, (b2_, c2, D2), dtype=jnp.float32)

    out_norm_r = adaptive_instance_norm_3d(x_r, weight_r, bias_r, film_layer=False)
    out_film_r = adaptive_instance_norm_3d(x_r, weight_r, bias_r, film_layer=True)
    jax.block_until_ready((out_norm_r, out_film_r))

    assert jnp.allclose(out_norm_r, _reference(x_r, weight_r, bias_r, film_layer=False),
                        atol=1e-4, rtol=1e-4)
    assert jnp.allclose(out_film_r, _reference(x_r, weight_r, bias_r, film_layer=True),
                        atol=1e-5, rtol=1e-5)

    print("KERNEL_OK")
</pallas_src>

<mosaic_0001>
module attributes {stable_mosaic.version = 11 : i64} {
  func.func @_adain_norm_kernel(%arg0: i32, %arg1: memref<64x256xf32, #tpu.memory_space<vmem>>, %arg2: memref<64x2xf32, #tpu.memory_space<vmem>>, %arg3: memref<64x256xf32, #tpu.memory_space<vmem>>) attributes {dimension_semantics = [#tpu.dimension_semantics<core_parallel>], iteration_bounds = array<i64: 1>, scalar_prefetch = 0 : i64, scratch_operands = 0 : i64, tpu.core_type = #tpu.core_type<tc>, window_params = [{transform_indices = @transform_0, window_bounds = array<i64: 64, 256>}, {transform_indices = @transform_1, window_bounds = array<i64: 64, 2>}, {transform_indices = @transform_2, window_bounds = array<i64: 64, 256>}]} {
    %c0 = arith.constant 0 : index
    %c0_0 = arith.constant 0 : index
    %0 = vector.load %arg1[%c0, %c0_0] : memref<64x256xf32, #tpu.memory_space<vmem>>, vector<64x256xf32>
    %c0_1 = arith.constant 0 : index
    %c0_2 = arith.constant 0 : index
    %1 = vector.load %arg2[%c0_1, %c0_2] : memref<64x2xf32, #tpu.memory_space<vmem>>, vector<64x1xf32>
    %c0_3 = arith.constant 0 : index
    %c1 = arith.constant 1 : index
    %2 = vector.load %arg2[%c0_3, %c1] : memref<64x2xf32, #tpu.memory_space<vmem>>, vector<64x1xf32>
    %cst = arith.constant dense<0.000000e+00> : vector<64xf32>
    %3 = vector.multi_reduction <add>, %0, %cst [1] : vector<64x256xf32> to vector<64xf32>
    %4 = vector.shape_cast %3 : vector<64xf32> to vector<64x1xf32>
    %5 = arith.mulf %0, %0 : vector<64x256xf32>
    %cst_4 = arith.constant dense<0.000000e+00> : vector<64xf32>
    %6 = vector.multi_reduction <add>, %5, %cst_4 [1] : vector<64x256xf32> to vector<64xf32>
    %7 = vector.shape_cast %6 : vector<64xf32> to vector<64x1xf32>
    %cst_5 = arith.constant 3.906250e-03 : f32
    %8 = vector.broadcast %cst_5 : f32 to vector<64x1xf32>
    %9 = arith.mulf %4, %8 : vector<64x1xf32>
    %cst_6 = arith.constant 3.906250e-03 : f32
    %10 = vector.broadcast %cst_6 : f32 to vector<64x1xf32>
    %11 = arith.mulf %7, %10 : vector<64x1xf32>
    %12 = arith.mulf %9, %9 : vector<64x1xf32>
    %13 = arith.subf %11, %12 : vector<64x1xf32>
    %cst_7 = arith.constant 0.000000e+00 : f32
    %14 = vector.broadcast %cst_7 : f32 to vector<64x1xf32>
    %15 = arith.maximumf %13, %14 : vector<64x1xf32>
    %cst_8 = arith.constant 9.99999974E-6 : f32
    %16 = vector.broadcast %cst_8 : f32 to vector<64x1xf32>
    %17 = arith.addf %15, %16 : vector<64x1xf32>
    %18 = math.rsqrt %17 : vector<64x1xf32>
    %19 = arith.mulf %18, %1 : vector<64x1xf32>
    %20 = arith.mulf %9, %19 : vector<64x1xf32>
    %21 = arith.subf %2, %20 : vector<64x1xf32>
    %22 = vector.broadcast %19 : vector<64x1xf32> to vector<64x256xf32>
    %23 = arith.mulf %0, %22 : vector<64x256xf32>
    %24 = vector.broadcast %21 : vector<64x1xf32> to vector<64x256xf32>
    %25 = arith.addf %23, %24 : vector<64x256xf32>
    %c0_9 = arith.constant 0 : index
    %c0_10 = arith.constant 0 : index
    %26 = vector.load %arg3[%c0_9, %c0_10] : memref<64x256xf32, #tpu.memory_space<vmem>>, vector<64x256xf32>
    tpu.vector_store %arg3[%c0_9, %c0_10], %25 {strides = array<i32>} : memref<64x256xf32, #tpu.memory_space<vmem>>, vector<64x256xf32>,
    return
  }
  func.func @transform_0(%arg0: i32) -> (i32, i32) {
    %c0_i32 = arith.constant 0 : i32
    %c0_i32_0 = arith.constant 0 : i32
    return %arg0, %c0_i32 : i32, i32
  }
  func.func @transform_1(%arg0: i32) -> (i32, i32) {
    %c0_i32 = arith.constant 0 : i32
    %c0_i32_0 = arith.constant 0 : i32
    return %arg0, %c0_i32 : i32, i32
  }
  func.func @transform_2(%arg0: i32) -> (i32, i32) {
    %c0_i32 = arith.constant 0 : i32
    %c0_i32_0 = arith.constant 0 : i32
    return %arg0, %c0_i32 : i32, i32
  }
}

module attributes {stable_mosaic.version = 11 : i64} {
  func.func @_adain_norm_kernel(%arg0: i32, %arg1: memref<64x256xf32, #tpu.memory_space<vmem>>, %arg2: memref<64x2xf32, #tpu.memory_space<vmem>>, %arg3: memref<64x256xf32, #tpu.memory_space<vmem>>) attributes {dimension_semantics = [#tpu.dimension_semantics<parallel>], iteration_bounds = array<i64: 1>, scalar_prefetch = 0 : i64, scratch_operands = 0 : i64, tpu.core_type = #tpu.core_type<tc>, window_params = [{transform_indices = @transform_0, window_bounds = array<i64: 64, 256>}, {transform_indices = @transform_1, window_bounds = array<i64: 64, 2>}, {transform_indices = @transform_2, window_bounds = array<i64: 64, 256>}]} {
    %c0 = arith.constant 0 : index
    %c0_0 = arith.constant 0 : index
    %0 = vector.load %arg1[%c0, %c0_0] : memref<64x256xf32, #tpu.memory_space<vmem>>, vector<64x256xf32>
    %c0_1 = arith.constant 0 : index
    %c0_2 = arith.constant 0 : index
    %1 = vector.load %arg2[%c0_1, %c0_2] : memref<64x2xf32, #tpu.memory_space<vmem>>, vector<64x1xf32>
    %c0_3 = arith.constant 0 : index
    %c1 = arith.constant 1 : index
    %2 = vector.load %arg2[%c0_3, %c1] : memref<64x2xf32, #tpu.memory_space<vmem>>, vector<64x1xf32>
    %cst = arith.constant dense<0.000000e+00> : vector<64xf32>
    %3 = vector.multi_reduction <add>, %0, %cst [1] : vector<64x256xf32> to vector<64xf32>
    %4 = vector.shape_cast %3 : vector<64xf32> to vector<64x1xf32>
    %5 = arith.mulf %0, %0 : vector<64x256xf32>
    %cst_4 = arith.constant dense<0.000000e+00> : vector<64xf32>
    %6 = vector.multi_reduction <add>, %5, %cst_4 [1] : vector<64x256xf32> to vector<64xf32>
    %7 = vector.shape_cast %6 : vector<64xf32> to vector<64x1xf32>
    %cst_5 = arith.constant 3.906250e-03 : f32
    %8 = vector.broadcast %cst_5 : f32 to vector<64x1xf32>
    %9 = arith.mulf %4, %8 : vector<64x1xf32>
    %cst_6 = arith.constant 3.906250e-03 : f32
    %10 = vector.broadcast %cst_6 : f32 to vector<64x1xf32>
    %11 = arith.mulf %7, %10 : vector<64x1xf32>
    %12 = arith.mulf %9, %9 : vector<64x1xf32>
    %13 = arith.subf %11, %12 : vector<64x1xf32>
    %cst_7 = arith.constant 0.000000e+00 : f32
    %14 = vector.broadcast %cst_7 : f32 to vector<64x1xf32>
    %15 = arith.maximumf %13, %14 : vector<64x1xf32>
    %cst_8 = arith.constant 9.99999974E-6 : f32
    %16 = vector.broadcast %cst_8 : f32 to vector<64x1xf32>
    %17 = arith.addf %15, %16 : vector<64x1xf32>
    %18 = math.rsqrt %17 : vector<64x1xf32>
    %19 = arith.mulf %18, %1 : vector<64x1xf32>
    %20 = arith.mulf %9, %19 : vector<64x1xf32>
    %21 = arith.subf %2, %20 : vector<64x1xf32>
    %22 = vector.broadcast %19 : vector<64x1xf32> to vector<64x256xf32>
    %23 = arith.mulf %0, %22 : vector<64x256xf32>
    %24 = vector.broadcast %21 : vector<64x1xf32> to vector<64x256xf32>
    %25 = arith.addf %23, %24 : vector<64x256xf32>
    %c0_9 = arith.constant 0 : index
    %c0_10 = arith.constant 0 : index
    %26 = vector.load %arg3[%c0_9, %c0_10] : memref<64x256xf32, #tpu.memory_space<vmem>>, vector<64x256xf32>
    tpu.vector_store %arg3[%c0_9, %c0_10], %25 {strides = array<i32>} : memref<64x256xf32, #tpu.memory_space<vmem>>, vector<64x256xf32>,
    return
  }
  func.func @transform_0(%arg0: i32) -> (i32, i32) {
    %c0_i32 = arith.constant 0 : i32
    %c0_i32_0 = arith.constant 0 : i32
    return %arg0, %c0_i32 : i32, i32
  }
  func.func @transform_1(%arg0: i32) -> (i32, i32) {
    %c0_i32 = arith.constant 0 : i32
    %c0_i32_0 = arith.constant 0 : i32
    return %arg0, %c0_i32 : i32, i32
  }
  func.func @transform_2(%arg0: i32) -> (i32, i32) {
    %c0_i32 = arith.constant 0 : i32
    %c0_i32_0 = arith.constant 0 : i32
    return %arg0, %c0_i32 : i32, i32
  }
}

</mosaic_0001>

<llo_original>
// kernel: tpu_custom_call.1
$region0: #{tpu_custom_call.1}
  #allocation0 [shape = 'u32[]', space=smem, size = 0x4, offset = 0x4, fixed_abs, tag = 'smem constant byte address 0x4 - core index']
  #allocation1 [shape = 'u32[144,128]{1,0:T(1,128)}', space=vmem, size = 0x12000, scoped, tag = 'internal scratch']
  %s0 = inlined_call_operand.hbm [shape: f32[64,256], index: 0, kind: input, shape index: {}]
  %s1 = inlined_call_operand.vmem [shape: f32[64,2], index: 1, kind: input, shape index: {}]
  %s2 = inlined_call_operand.hbm [shape: f32[64,256], index: 2, kind: output, shape index: {}]
  %s3 = sld [smem:[#allocation0]]
  $region22: #{tpu_custom_call.1} parent=0
    _
  %s5 = ssub.s32 1, %s3
  %s6 = scalar_select 0, %s5, %s3
  $region1: #{tpu_custom_call.1} parent=0
    #allocation2 [shape = 'u8[65536]{0}', space=vmem, size = 0x10000, scoped, tag = 'input window, operand 0, single buffered']
    #allocation3 [shape = 's32[1]{0}', space=sflag, size = 0x4, scoped, tag = 'scoped memory for tpu_custom_call.1']
    #allocation4 [shape = 's32[1]{0}', space=sflag, size = 0x4, scoped, tag = 'scoped memory for tpu_custom_call.1']
    #allocation5 [shape = 'u8[65536]{0}', space=vmem, size = 0x10000, scoped, tag = 'output window, operand 0, single buffered']
    %7 = vsyncpa [#allocation3], 0
    %8 = vsyncpa [#allocation4], 0
    // Predicated region
    $region2: #{tpu_custom_call.1} parent=1 // pred_check
      _
    $region3: #{tpu_custom_call.1} parent=1 // pred_check_branch
      %10 = sbr.rel (0) target = $region5
    $region4: #{tpu_custom_call.1} parent=1 // pred_region
      %s11 = smul.u32 8, %s6
      %s13 = ssub.s32 2048, 2048
      %14 = vsyncadd [#allocation3], %s13
      %s15 = smul.addr %s11, 2
      %s16 = smul.addr %s15, 128
      %s17 = scalar_lea.hbm %s0, %s16
      %s18 = sshll.u32 [#allocation2], 4
      %s19 = int_to_ptr.vmem [resolvable:$true] %s18
      %24 = dma.hbm_to_vmem [thread:$0]  %s17, 2048, %s19, [#allocation3], 256, 256, 16
    $region5: #{tpu_custom_call.1} parent=1 // pred_fallthru
      _
    // Predicated region
    $region6: #{tpu_custom_call.1} parent=1 // pred_check
      _
    $region7: #{tpu_custom_call.1} parent=1 // pred_check_branch
      %26 = sbr.rel (0) target = $region9
    $region8: #{tpu_custom_call.1} parent=1 // pred_region
      %s27 = smul.u32 8, %s6
      %p28 = scmp.lt.s32.totalorder %s27, 7
      %s29 = scalar_select %p28, %s27, 7
      %s30 = smul.addr %s29, 8
      %s31 = scalar_lea.vmem %s1, %s30
      %s32 = smul.u32 8, %s6
    $region9: #{tpu_custom_call.1} parent=1 // pred_fallthru
      _
    // Predicated region
    $region10: #{tpu_custom_call.1} parent=1 // pred_check
      _
    $region11: #{tpu_custom_call.1} parent=1 // pred_check_branch
      %34 = sbr.rel (0) target = $region13
    $region12: #{tpu_custom_call.1} parent=1 // pred_region
      %35 = dma.done [#allocation3], 2048
    $region13: #{tpu_custom_call.1} parent=1 // pred_fallthru
      _
    %s36 = smul.u32 8, %s6
    %p37 = scmp.lt.s32.totalorder %s36, 7
    %s38 = scalar_select %p37, %s36, 7
    %s39 = smul.addr %s38, 8
    %s40 = scalar_lea.vmem %s1, %s39
    %s41 = smul.u32 8, %s6
    %s42 = smul.u32 8, %s6
    %p43 = scmp.lt.s32.totalorder %s42, 7
    %s44 = scalar_select %p43, %s42, 7
    %s45 = smul.addr %s44, 8
    %s46 = scalar_lea.vmem %s1, %s45
    %s47 = smul.u32 8, %s6
    %s48 = smul.u32 8, %s6
    %v49 = vld [vmem:[#allocation2] sm:$0xff]
    %v50 = vld [vmem:[#allocation2 + $0x8] sm:$0xff]
    %v51 = vld [vmem:[#allocation2 + $0x10] sm:$0xff]
    %v52 = vld [vmem:[#allocation2 + $0x18] sm:$0xff]
    %v53 = vld [vmem:[#allocation2 + $0x20] sm:$0xff]
    %v54 = vld [vmem:[#allocation2 + $0x28] sm:$0xff]
    %v55 = vld [vmem:[#allocation2 + $0x30] sm:$0xff]
    %v56 = vld [vmem:[#allocation2 + $0x38] sm:$0xff]
    %v57 = vld [vmem:[#allocation2 + $0x40] sm:$0xff]
    %v58 = vld [vmem:[#allocation2 + $0x48] sm:$0xff]
    %v59 = vld [vmem:[#allocation2 + $0x50] sm:$0xff]
    %v60 = vld [vmem:[#allocation2 + $0x58] sm:$0xff]
    %v61 = vld [vmem:[#allocation2 + $0x60] sm:$0xff]
    %v62 = vld [vmem:[#allocation2 + $0x68] sm:$0xff]
    %v63 = vld [vmem:[#allocation2 + $0x70] sm:$0xff]
    %v64 = vld [vmem:[#allocation2 + $0x78] sm:$0xff]
    %v65 = vld [vmem:[%s46] sm:$0xff]
    %v66 = vld [vmem:[%s46 + $0x8] sm:$0xff]
    %v67 = vld [vmem:[%s46 + $0x10] sm:$0xff]
    %v68 = vld [vmem:[%s46 + $0x18] sm:$0xff]
    %v69 = vld [vmem:[%s46 + $0x20] sm:$0xff]
    %v70 = vld [vmem:[%s46 + $0x28] sm:$0xff]
    %v71 = vld [vmem:[%s46 + $0x30] sm:$0xff]
    %v72 = vld [vmem:[%s46 + $0x38] sm:$0xff]
    %v73 = vadd.f32 %v49, %v50
    %74 = vadd.xlane.f32.xlu0 %v73
    %v75 = vpop.xlane.xlu0 %74
    %v76 = vadd.f32 %v51, %v52
    %77 = vadd.xlane.f32.xlu0 %v76
    %v78 = vpop.xlane.xlu0 %77
    %v79 = vadd.f32 %v53, %v54
    %80 = vadd.xlane.f32.xlu0 %v79
    %v81 = vpop.xlane.xlu0 %80
    %v82 = vadd.f32 %v55, %v56
    %83 = vadd.xlane.f32.xlu0 %v82
    %v84 = vpop.xlane.xlu0 %83
    %v85 = vadd.f32 %v57, %v58
    %86 = vadd.xlane.f32.xlu0 %v85
    %v87 = vpop.xlane.xlu0 %86
    %v88 = vadd.f32 %v59, %v60
    %89 = vadd.xlane.f32.xlu0 %v88
    %v90 = vpop.xlane.xlu0 %89
    %v91 = vadd.f32 %v61, %v62
    %92 = vadd.xlane.f32.xlu0 %v91
    %v93 = vpop.xlane.xlu0 %92
    %v94 = vadd.f32 %v63, %v64
    %95 = vadd.xlane.f32.xlu0 %v94
    %v96 = vpop.xlane.xlu0 %95
    %v97 = vmul.f32 %v49, %v49
    %v98 = vmul.f32 %v50, %v50
    %v99 = vmul.f32 %v51, %v51
    %v100 = vmul.f32 %v52, %v52
    %v101 = vmul.f32 %v53, %v53
    %v102 = vmul.f32 %v54, %v54
    %v103 = vmul.f32 %v55, %v55
    %v104 = vmul.f32 %v56, %v56
    %v105 = vmul.f32 %v57, %v57
    %v106 = vmul.f32 %v58, %v58
    %v107 = vmul.f32 %v59, %v59
    %v108 = vmul.f32 %v60, %v60
    %v109 = vmul.f32 %v61, %v61
    %v110 = vmul.f32 %v62, %v62
    %v111 = vmul.f32 %v63, %v63
    %v112 = vmul.f32 %v64, %v64
    %v113 = vadd.f32 %v97, %v98
    %114 = vadd.xlane.f32.xlu0 %v113
    %v115 = vpop.xlane.xlu0 %114
    %v116 = vadd.f32 %v99, %v100
    %117 = vadd.xlane.f32.xlu0 %v116
    %v118 = vpop.xlane.xlu0 %117
    %v119 = vadd.f32 %v101, %v102
    %120 = vadd.xlane.f32.xlu0 %v119
    %v121 = vpop.xlane.xlu0 %120
    %v122 = vadd.f32 %v103, %v104
    %123 = vadd.xlane.f32.xlu0 %v122
    %v124 = vpop.xlane.xlu0 %123
    %v125 = vadd.f32 %v105, %v106
    %126 = vadd.xlane.f32.xlu0 %v125
    %v127 = vpop.xlane.xlu0 %126
    %v128 = vadd.f32 %v107, %v108
    %129 = vadd.xlane.f32.xlu0 %v128
    %v130 = vpop.xlane.xlu0 %129
    %v131 = vadd.f32 %v109, %v110
    %132 = vadd.xlane.f32.xlu0 %v131
    %v133 = vpop.xlane.xlu0 %132
    %v134 = vadd.f32 %v111, %v112
    %135 = vadd.xlane.f32.xlu0 %v134
    %v136 = vpop.xlane.xlu0 %135
    %v137 = vmul.f32 %v75, 0.00390625
    %v138 = vmul.f32 %v78, 0.00390625
    %v139 = vmul.f32 %v81, 0.00390625
    %v140 = vmul.f32 %v84, 0.00390625
    %v141 = vmul.f32 %v87, 0.00390625
    %v142 = vmul.f32 %v90, 0.00390625
    %v143 = vmul.f32 %v93, 0.00390625
    %v144 = vmul.f32 %v96, 0.00390625
    %v145 = vmul.f32 %v115, 0.00390625
    %v146 = vmul.f32 %v118, 0.00390625
    %v147 = vmul.f32 %v121, 0.00390625
    %v148 = vmul.f32 %v124, 0.00390625
    %v149 = vmul.f32 %v127, 0.00390625
    %v150 = vmul.f32 %v130, 0.00390625
    %v151 = vmul.f32 %v133, 0.00390625
    %v152 = vmul.f32 %v136, 0.00390625
    %v153 = vmul.f32 %v137, %v137
    %v154 = vmul.f32 %v138, %v138
    %v155 = vmul.f32 %v139, %v139
    %v156 = vmul.f32 %v140, %v140
    %v157 = vmul.f32 %v141, %v141
    %v158 = vmul.f32 %v142, %v142
    %v159 = vmul.f32 %v143, %v143
    %v160 = vmul.f32 %v144, %v144
    %v161 = vsub.f32 %v145, %v153
    %v162 = vsub.f32 %v146, %v154
    %v163 = vsub.f32 %v147, %v155
    %v164 = vsub.f32 %v148, %v156
    %v165 = vsub.f32 %v149, %v157
    %v166 = vsub.f32 %v150, %v158
    %v167 = vsub.f32 %v151, %v159
    %v168 = vsub.f32 %v152, %v160
    %v169 = vmax.f32 %v161, 0.0
    %v170 = vmax.f32 %v162, 0.0
    %v171 = vmax.f32 %v163, 0.0
    %v172 = vmax.f32 %v164, 0.0
    %v173 = vmax.f32 %v165, 0.0
    %v174 = vmax.f32 %v166, 0.0
    %v175 = vmax.f32 %v167, 0.0
    %v176 = vmax.f32 %v168, 0.0
    %v177 = vadd.f32 %v169, 1e-05
    %v178 = vadd.f32 %v170, 1e-05
    %v179 = vadd.f32 %v171, 1e-05
    %v180 = vadd.f32 %v172, 1e-05
    %v181 = vadd.f32 %v173, 1e-05
    %v182 = vadd.f32 %v174, 1e-05
    %v183 = vadd.f32 %v175, 1e-05
    %v184 = vadd.f32 %v176, 1e-05
    %v185 = vrsqrt.pop %v177
    %v186 = vrsqrt.pop %v178
    %v187 = vrsqrt.pop %v179
    %v188 = vrsqrt.pop %v180
    %v189 = vrsqrt.pop %v181
    %v190 = vrsqrt.pop %v182
    %v191 = vrsqrt.pop %v183
    %v192 = vrsqrt.pop %v184
    %v193 = vmul.f32 %v185, %v65
    %v194 = vmul.f32 %v186, %v66
    %v195 = vmul.f32 %v187, %v67
    %v196 = vmul.f32 %v188, %v68
    %v197 = vmul.f32 %v189, %v69
    %v198 = vmul.f32 %v190, %v70
    %v199 = vmul.f32 %v191, %v71
    %v200 = vmul.f32 %v192, %v72
    %v201 = vmul.f32 %v137, %v193
    %v202 = vmul.f32 %v138, %v194
    %v203 = vmul.f32 %v139, %v195
    %v204 = vmul.f32 %v140, %v196
    %v205 = vmul.f32 %v141, %v197
    %v206 = vmul.f32 %v142, %v198
    %v207 = vmul.f32 %v143, %v199
    %v208 = vmul.f32 %v144, %v200
    %217 = vrot.lane.b32.xlu0 %v201, 1
    %v218 = vpop.permute.xlu0 %217
    %219 = vrot.lane.b32.xlu0 %v202, 1
    %v220 = vpop.permute.xlu0 %219
    %221 = vrot.lane.b32.xlu0 %v203, 1
    %v222 = vpop.permute.xlu0 %221
    %223 = vrot.lane.b32.xlu0 %v204, 1
    %v224 = vpop.permute.xlu0 %223
    %225 = vrot.lane.b32.xlu0 %v205, 1
    %v226 = vpop.permute.xlu0 %225
    %227 = vrot.lane.b32.xlu0 %v206, 1
    %v228 = vpop.permute.xlu0 %227
    %229 = vrot.lane.b32.xlu0 %v207, 1
    %v230 = vpop.permute.xlu0 %229
    %231 = vrot.lane.b32.xlu0 %v208, 1
    %v232 = vpop.permute.xlu0 %231
    %v241 = vsub.f32 %v65, %v218
    %v242 = vsub.f32 %v66, %v220
    %v243 = vsub.f32 %v67, %v222
    %v244 = vsub.f32 %v68, %v224
    %v245 = vsub.f32 %v69, %v226
    %v246 = vsub.f32 %v70, %v228
    %v247 = vsub.f32 %v71, %v230
    %v248 = vsub.f32 %v72, %v232
    %250 = vset.pattern.permute.xlu0 0
    %251 = vperm.xlu0 %250, %v193
    %v252 = vpop.permute.xlu0 %251
    %255 = vset.pattern.permute.xlu0 0
    %256 = vperm.xlu0 %255, %v194
    %v257 = vpop.permute.xlu0 %256
    %260 = vset.pattern.permute.xlu0 0
    %261 = vperm.xlu0 %260, %v195
    %v262 = vpop.permute.xlu0 %261
    %265 = vset.pattern.permute.xlu0 0
    %266 = vperm.xlu0 %265, %v196
    %v267 = vpop.permute.xlu0 %266
    %270 = vset.pattern.permute.xlu0 0
    %271 = vperm.xlu0 %270, %v197
    %v272 = vpop.permute.xlu0 %271
    %275 = vset.pattern.permute.xlu0 0
    %276 = vperm.xlu0 %275, %v198
    %v277 = vpop.permute.xlu0 %276
    %280 = vset.pattern.permute.xlu0 0
    %281 = vperm.xlu0 %280, %v199
    %v282 = vpop.permute.xlu0 %281
    %285 = vset.pattern.permute.xlu0 0
    %286 = vperm.xlu0 %285, %v200
    %v287 = vpop.permute.xlu0 %286
    %v289 = vmul.f32 %v49, %v252
    %v290 = vmul.f32 %v50, %v252
    %v291 = vmul.f32 %v51, %v257
    %v292 = vmul.f32 %v52, %v257
    %v293 = vmul.f32 %v53, %v262
    %v294 = vmul.f32 %v54, %v262
    %v295 = vmul.f32 %v55, %v267
    %v296 = vmul.f32 %v56, %v267
    %v297 = vmul.f32 %v57, %v272
    %v298 = vmul.f32 %v58, %v272
    %v299 = vmul.f32 %v59, %v277
    %v300 = vmul.f32 %v60, %v277
    %v301 = vmul.f32 %v61, %v282
    %v302 = vmul.f32 %v62, %v282
    %v303 = vmul.f32 %v63, %v287
    %v304 = vmul.f32 %v64, %v287
    %306 = vset.pattern.permute.xlu0 1
    %307 = vperm.xlu0 %306, %v241
    %v308 = vpop.permute.xlu0 %307
    %311 = vset.pattern.permute.xlu0 1
    %312 = vperm.xlu0 %311, %v242
    %v313 = vpop.permute.xlu0 %312
    %316 = vset.pattern.permute.xlu0 1
    %317 = vperm.xlu0 %316, %v243
    %v318 = vpop.permute.xlu0 %317
    %321 = vset.pattern.permute.xlu0 1
    %322 = vperm.xlu0 %321, %v244
    %v323 = vpop.permute.xlu0 %322
    %326 = vset.pattern.permute.xlu0 1
    %327 = vperm.xlu0 %326, %v245
    %v328 = vpop.permute.xlu0 %327
    %331 = vset.pattern.permute.xlu0 1
    %332 = vperm.xlu0 %331, %v246
    %v333 = vpop.permute.xlu0 %332
    %336 = vset.pattern.permute.xlu0 1
    %337 = vperm.xlu0 %336, %v247
    %v338 = vpop.permute.xlu0 %337
    %341 = vset.pattern.permute.xlu0 1
    %342 = vperm.xlu0 %341, %v248
    %v343 = vpop.permute.xlu0 %342
    %v345 = vadd.f32 %v289, %v308
    %v346 = vadd.f32 %v290, %v308
    %v347 = vadd.f32 %v291, %v313
    %v348 = vadd.f32 %v292, %v313
    %v349 = vadd.f32 %v293, %v318
    %v350 = vadd.f32 %v294, %v318
    %v351 = vadd.f32 %v295, %v323
    %v352 = vadd.f32 %v296, %v323
    %v353 = vadd.f32 %v297, %v328
    %v354 = vadd.f32 %v298, %v328
    %v355 = vadd.f32 %v299, %v333
    %v356 = vadd.f32 %v300, %v333
    %v357 = vadd.f32 %v301, %v338
    %v358 = vadd.f32 %v302, %v338
    %v359 = vadd.f32 %v303, %v343
    %v360 = vadd.f32 %v304, %v343
    %361 = vst [vmem:[#allocation5] sm:$0xff] %v345
    %362 = vst [vmem:[#allocation5 + $0x8] sm:$0xff] %v346
    %363 = vst [vmem:[#allocation5 + $0x10] sm:$0xff] %v347
    %364 = vst [vmem:[#allocation5 + $0x18] sm:$0xff] %v348
    %365 = vst [vmem:[#allocation5 + $0x20] sm:$0xff] %v349
    %366 = vst [vmem:[#allocation5 + $0x28] sm:$0xff] %v350
    %367 = vst [vmem:[#allocation5 + $0x30] sm:$0xff] %v351
    %368 = vst [vmem:[#allocation5 + $0x38] sm:$0xff] %v352
    %369 = vst [vmem:[#allocation5 + $0x40] sm:$0xff] %v353
    %370 = vst [vmem:[#allocation5 + $0x48] sm:$0xff] %v354
    %371 = vst [vmem:[#allocation5 + $0x50] sm:$0xff] %v355
    %372 = vst [vmem:[#allocation5 + $0x58] sm:$0xff] %v356
    %373 = vst [vmem:[#allocation5 + $0x60] sm:$0xff] %v357
    %374 = vst [vmem:[#allocation5 + $0x68] sm:$0xff] %v358
    %375 = vst [vmem:[#allocation5 + $0x70] sm:$0xff] %v359
    %376 = vst [vmem:[#allocation5 + $0x78] sm:$0xff] %v360
    // Predicated region
    $region14: #{tpu_custom_call.1} parent=1 // pred_check
      _
    $region15: #{tpu_custom_call.1} parent=1 // pred_check_branch
      %378 = sbr.rel (0) target = $region17
    $region16: #{tpu_custom_call.1} parent=1 // pred_region
      %s379 = smul.u32 8, %s6
      %s381 = ssub.s32 2048, 2048
      %382 = vsyncadd [#allocation4], %s381
      %s383 = smul.addr %s379, 2
      %s384 = smul.addr %s383, 128
      %s385 = scalar_lea.hbm %s2, %s384
      %s386 = sshll.u32 [#allocation5], 4
      %s387 = int_to_ptr.vmem [resolvable:$true] %s386
      %392 = dma.vmem_to_hbm [thread:$0]  %s387, 2048, %s385, [#allocation4], 256, 256, 16
    $region17: #{tpu_custom_call.1} parent=1 // pred_fallthru
      _
    // Predicated region
    $region18: #{tpu_custom_call.1} parent=1 // pred_check
      _
    $region19: #{tpu_custom_call.1} parent=1 // pred_check_branch
      %394 = sbr.rel (0) target = $region21
    $region20: #{tpu_custom_call.1} parent=1 // pred_region
      %395 = dma.done [#allocation4], 2048
    $region21: #{tpu_custom_call.1} parent=1 // pred_fallthru
      _
    %396 = vsyncpa [#allocation3], 1
    %397 = vsyncpa [#allocation4], 1

// kernel: tpu_custom_call.1
$region0: #{tpu_custom_call.1}
  #allocation0 [shape = 'u32[]', space=smem, size = 0x4, offset = 0x4, fixed_abs, tag = 'smem constant byte address 0x4 - core index']
  #allocation1 [shape = 'u32[144,128]{1,0:T(1,128)}', space=vmem, size = 0x12000, scoped, tag = 'internal scratch']
  %s0 = inlined_call_operand.hbm [shape: f32[64,256], index: 0, kind: input, shape index: {}]
  %s1 = inlined_call_operand.vmem [shape: f32[64,2], index: 1, kind: input, shape index: {}]
  %s2 = inlined_call_operand.hbm [shape: f32[64,256], index: 2, kind: output, shape index: {}]
  %s3 = sld [smem:[#allocation0]]
  $region22: #{tpu_custom_call.1} parent=0
    _
  %s5 = ssub.s32 1, %s3
  %s6 = scalar_select 0, %s5, %s3
  $region1: #{tpu_custom_call.1} parent=0
    #allocation2 [shape = 'u8[65536]{0}', space=vmem, size = 0x10000, scoped, tag = 'input window, operand 0, single buffered']
    #allocation3 [shape = 's32[1]{0}', space=sflag, size = 0x4, scoped, tag = 'scoped memory for tpu_custom_call.1']
    #allocation4 [shape = 's32[1]{0}', space=sflag, size = 0x4, scoped, tag = 'scoped memory for tpu_custom_call.1']
    #allocation5 [shape = 'u8[65536]{0}', space=vmem, size = 0x10000, scoped, tag = 'output window, operand 0, single buffered']
    %7 = vsyncpa [#allocation3], 0
    %8 = vsyncpa [#allocation4], 0
    // Predicated region
    $region2: #{tpu_custom_call.1} parent=1 // pred_check
      _
    $region3: #{tpu_custom_call.1} parent=1 // pred_check_branch
      %10 = sbr.rel (0) target = $region5
    $region4: #{tpu_custom_call.1} parent=1 // pred_region
      %s12 = ssub.s32 2048, 2048
      %13 = vsyncadd [#allocation3], %s12
      %s14 = sshll.u32 [#allocation2], 4
      %s15 = int_to_ptr.vmem [resolvable:$true] %s14
      %20 = dma.hbm_to_vmem [thread:$0]  %s0, 2048, %s15, [#allocation3], 256, 256, 16
    $region5: #{tpu_custom_call.1} parent=1 // pred_fallthru
      _
    // Predicated region
    $region6: #{tpu_custom_call.1} parent=1 // pred_check
      _
    $region7: #{tpu_custom_call.1} parent=1 // pred_check_branch
      %22 = sbr.rel (0) target = $region9
    $region8: #{tpu_custom_call.1} parent=1 // pred_region
      _
    $region9: #{tpu_custom_call.1} parent=1 // pred_fallthru
      _
    // Predicated region
    $region10: #{tpu_custom_call.1} parent=1 // pred_check
      _
    $region11: #{tpu_custom_call.1} parent=1 // pred_check_branch
      %24 = sbr.rel (0) target = $region13
    $region12: #{tpu_custom_call.1} parent=1 // pred_region
      %25 = dma.done [#allocation3], 2048
    $region13: #{tpu_custom_call.1} parent=1 // pred_fallthru
      _
    %v26 = vld [vmem:[#allocation2] sm:$0xff]
    %v27 = vld [vmem:[#allocation2 + $0x8] sm:$0xff]
    %v28 = vld [vmem:[#allocation2 + $0x10] sm:$0xff]
    %v29 = vld [vmem:[#allocation2 + $0x18] sm:$0xff]
    %v30 = vld [vmem:[#allocation2 + $0x20] sm:$0xff]
    %v31 = vld [vmem:[#allocation2 + $0x28] sm:$0xff]
    %v32 = vld [vmem:[#allocation2 + $0x30] sm:$0xff]
    %v33 = vld [vmem:[#allocation2 + $0x38] sm:$0xff]
    %v34 = vld [vmem:[#allocation2 + $0x40] sm:$0xff]
    %v35 = vld [vmem:[#allocation2 + $0x48] sm:$0xff]
    %v36 = vld [vmem:[#allocation2 + $0x50] sm:$0xff]
    %v37 = vld [vmem:[#allocation2 + $0x58] sm:$0xff]
    %v38 = vld [vmem:[#allocation2 + $0x60] sm:$0xff]
    %v39 = vld [vmem:[#allocation2 + $0x68] sm:$0xff]
    %v40 = vld [vmem:[#allocation2 + $0x70] sm:$0xff]
    %v41 = vld [vmem:[#allocation2 + $0x78] sm:$0xff]
    %v42 = vld [vmem:[%s1] sm:$0xff]
    %v43 = vld [vmem:[%s1 + $0x8] sm:$0xff]
    %v44 = vld [vmem:[%s1 + $0x10] sm:$0xff]
    %v45 = vld [vmem:[%s1 + $0x18] sm:$0xff]
    %v46 = vld [vmem:[%s1 + $0x20] sm:$0xff]
    %v47 = vld [vmem:[%s1 + $0x28] sm:$0xff]
    %v48 = vld [vmem:[%s1 + $0x30] sm:$0xff]
    %v49 = vld [vmem:[%s1 + $0x38] sm:$0xff]
    %v50 = vadd.f32 %v26, %v27
    %51 = vadd.xlane.f32.xlu0 %v50
    %v52 = vpop.xlane.xlu0 %51
    %v53 = vadd.f32 %v28, %v29
    %54 = vadd.xlane.f32.xlu0 %v53
    %v55 = vpop.xlane.xlu0 %54
    %v56 = vadd.f32 %v30, %v31
    %57 = vadd.xlane.f32.xlu0 %v56
    %v58 = vpop.xlane.xlu0 %57
    %v59 = vadd.f32 %v32, %v33
    %60 = vadd.xlane.f32.xlu0 %v59
    %v61 = vpop.xlane.xlu0 %60
    %v62 = vadd.f32 %v34, %v35
    %63 = vadd.xlane.f32.xlu0 %v62
    %v64 = vpop.xlane.xlu0 %63
    %v65 = vadd.f32 %v36, %v37
    %66 = vadd.xlane.f32.xlu0 %v65
    %v67 = vpop.xlane.xlu0 %66
    %v68 = vadd.f32 %v38, %v39
    %69 = vadd.xlane.f32.xlu0 %v68
    %v70 = vpop.xlane.xlu0 %69
    %v71 = vadd.f32 %v40, %v41
    %72 = vadd.xlane.f32.xlu0 %v71
    %v73 = vpop.xlane.xlu0 %72
    %v74 = vmul.f32 %v26, %v26
    %v75 = vmul.f32 %v27, %v27
    %v76 = vmul.f32 %v28, %v28
    %v77 = vmul.f32 %v29, %v29
    %v78 = vmul.f32 %v30, %v30
    %v79 = vmul.f32 %v31, %v31
    %v80 = vmul.f32 %v32, %v32
    %v81 = vmul.f32 %v33, %v33
    %v82 = vmul.f32 %v34, %v34
    %v83 = vmul.f32 %v35, %v35
    %v84 = vmul.f32 %v36, %v36
    %v85 = vmul.f32 %v37, %v37
    %v86 = vmul.f32 %v38, %v38
    %v87 = vmul.f32 %v39, %v39
    %v88 = vmul.f32 %v40, %v40
    %v89 = vmul.f32 %v41, %v41
    %v90 = vadd.f32 %v74, %v75
    %91 = vadd.xlane.f32.xlu0 %v90
    %v92 = vpop.xlane.xlu0 %91
    %v93 = vadd.f32 %v76, %v77
    %94 = vadd.xlane.f32.xlu0 %v93
    %v95 = vpop.xlane.xlu0 %94
    %v96 = vadd.f32 %v78, %v79
    %97 = vadd.xlane.f32.xlu0 %v96
    %v98 = vpop.xlane.xlu0 %97
    %v99 = vadd.f32 %v80, %v81
    %100 = vadd.xlane.f32.xlu0 %v99
    %v101 = vpop.xlane.xlu0 %100
    %v102 = vadd.f32 %v82, %v83
    %103 = vadd.xlane.f32.xlu0 %v102
    %v104 = vpop.xlane.xlu0 %103
    %v105 = vadd.f32 %v84, %v85
    %106 = vadd.xlane.f32.xlu0 %v105
    %v107 = vpop.xlane.xlu0 %106
    %v108 = vadd.f32 %v86, %v87
    %109 = vadd.xlane.f32.xlu0 %v108
    %v110 = vpop.xlane.xlu0 %109
    %v111 = vadd.f32 %v88, %v89
    %112 = vadd.xlane.f32.xlu0 %v111
    %v113 = vpop.xlane.xlu0 %112
    %v114 = vmul.f32 %v52, 0.00390625
    %v115 = vmul.f32 %v55, 0.00390625
    %v116 = vmul.f32 %v58, 0.00390625
    %v117 = vmul.f32 %v61, 0.00390625
    %v118 = vmul.f32 %v64, 0.00390625
    %v119 = vmul.f32 %v67, 0.00390625
    %v120 = vmul.f32 %v70, 0.00390625
    %v121 = vmul.f32 %v73, 0.00390625
    %v122 = vmul.f32 %v92, 0.00390625
    %v123 = vmul.f32 %v95, 0.00390625
    %v124 = vmul.f32 %v98, 0.00390625
    %v125 = vmul.f32 %v101, 0.00390625
    %v126 = vmul.f32 %v104, 0.00390625
    %v127 = vmul.f32 %v107, 0.00390625
    %v128 = vmul.f32 %v110, 0.00390625
    %v129 = vmul.f32 %v113, 0.00390625
    %v130 = vmul.f32 %v114, %v114
    %v131 = vmul.f32 %v115, %v115
    %v132 = vmul.f32 %v116, %v116
    %v133 = vmul.f32 %v117, %v117
    %v134 = vmul.f32 %v118, %v118
    %v135 = vmul.f32 %v119, %v119
    %v136 = vmul.f32 %v120, %v120
    %v137 = vmul.f32 %v121, %v121
    %v138 = vsub.f32 %v122, %v130
    %v139 = vsub.f32 %v123, %v131
    %v140 = vsub.f32 %v124, %v132
    %v141 = vsub.f32 %v125, %v133
    %v142 = vsub.f32 %v126, %v134
    %v143 = vsub.f32 %v127, %v135
    %v144 = vsub.f32 %v128, %v136
    %v145 = vsub.f32 %v129, %v137
    %v146 = vmax.f32 %v138, 0.0
    %v147 = vmax.f32 %v139, 0.0
    %v148 = vmax.f32 %v140, 0.0
    %v149 = vmax.f32 %v141, 0.0
    %v150 = vmax.f32 %v142, 0.0
    %v151 = vmax.f32 %v143, 0.0
    %v152 = vmax.f32 %v144, 0.0
    %v153 = vmax.f32 %v145, 0.0
    %v154 = vadd.f32 %v146, 1e-05
    %v155 = vadd.f32 %v147, 1e-05
    %v156 = vadd.f32 %v148, 1e-05
    %v157 = vadd.f32 %v149, 1e-05
    %v158 = vadd.f32 %v150, 1e-05
    %v159 = vadd.f32 %v151, 1e-05
    %v160 = vadd.f32 %v152, 1e-05
    %v161 = vadd.f32 %v153, 1e-05
    %v162 = vrsqrt.pop %v154
    %v163 = vrsqrt.pop %v155
    %v164 = vrsqrt.pop %v156
    %v165 = vrsqrt.pop %v157
    %v166 = vrsqrt.pop %v158
    %v167 = vrsqrt.pop %v159
    %v168 = vrsqrt.pop %v160
    %v169 = vrsqrt.pop %v161
    %v170 = vmul.f32 %v162, %v42
    %v171 = vmul.f32 %v163, %v43
    %v172 = vmul.f32 %v164, %v44
    %v173 = vmul.f32 %v165, %v45
    %v174 = vmul.f32 %v166, %v46
    %v175 = vmul.f32 %v167, %v47
    %v176 = vmul.f32 %v168, %v48
    %v177 = vmul.f32 %v169, %v49
    %v178 = vmul.f32 %v114, %v170
    %v179 = vmul.f32 %v115, %v171
    %v180 = vmul.f32 %v116, %v172
    %v181 = vmul.f32 %v117, %v173
    %v182 = vmul.f32 %v118, %v174
    %v183 = vmul.f32 %v119, %v175
    %v184 = vmul.f32 %v120, %v176
    %v185 = vmul.f32 %v121, %v177
    %194 = vrot.lane.b32.xlu0 %v178, 1
    %v195 = vpop.permute.xlu0 %194
    %196 = vrot.lane.b32.xlu0 %v179, 1
    %v197 = vpop.permute.xlu0 %196
    %198 = vrot.lane.b32.xlu0 %v180, 1
    %v199 = vpop.permute.xlu0 %198
    %200 = vrot.lane.b32.xlu0 %v181, 1
    %v201 = vpop.permute.xlu0 %200
    %202 = vrot.lane.b32.xlu0 %v182, 1
    %v203 = vpop.permute.xlu0 %202
    %204 = vrot.lane.b32.xlu0 %v183, 1
    %v205 = vpop.permute.xlu0 %204
    %206 = vrot.lane.b32.xlu0 %v184, 1
    %v207 = vpop.permute.xlu0 %206
    %208 = vrot.lane.b32.xlu0 %v185, 1
    %v209 = vpop.permute.xlu0 %208
    %v218 = vsub.f32 %v42, %v195
    %v219 = vsub.f32 %v43, %v197
    %v220 = vsub.f32 %v44, %v199
    %v221 = vsub.f32 %v45, %v201
    %v222 = vsub.f32 %v46, %v203
    %v223 = vsub.f32 %v47, %v205
    %v224 = vsub.f32 %v48, %v207
    %v225 = vsub.f32 %v49, %v209
    %227 = vset.pattern.permute.xlu0 0
    %228 = vperm.xlu0 %227, %v170
    %v229 = vpop.permute.xlu0 %228
    %232 = vset.pattern.permute.xlu0 0
    %233 = vperm.xlu0 %232, %v171
    %v234 = vpop.permute.xlu0 %233
    %237 = vset.pattern.permute.xlu0 0
    %238 = vperm.xlu0 %237, %v172
    %v239 = vpop.permute.xlu0 %238
    %242 = vset.pattern.permute.xlu0 0
    %243 = vperm.xlu0 %242, %v173
    %v244 = vpop.permute.xlu0 %243
    %247 = vset.pattern.permute.xlu0 0
    %248 = vperm.xlu0 %247, %v174
    %v249 = vpop.permute.xlu0 %248
    %252 = vset.pattern.permute.xlu0 0
    %253 = vperm.xlu0 %252, %v175
    %v254 = vpop.permute.xlu0 %253
    %257 = vset.pattern.permute.xlu0 0
    %258 = vperm.xlu0 %257, %v176
    %v259 = vpop.permute.xlu0 %258
    %262 = vset.pattern.permute.xlu0 0
    %263 = vperm.xlu0 %262, %v177
    %v264 = vpop.permute.xlu0 %263
    %v266 = vmul.f32 %v26, %v229
    %v267 = vmul.f32 %v27, %v229
    %v268 = vmul.f32 %v28, %v234
    %v269 = vmul.f32 %v29, %v234
    %v270 = vmul.f32 %v30, %v239
    %v271 = vmul.f32 %v31, %v239
    %v272 = vmul.f32 %v32, %v244
    %v273 = vmul.f32 %v33, %v244
    %v274 = vmul.f32 %v34, %v249
    %v275 = vmul.f32 %v35, %v249
    %v276 = vmul.f32 %v36, %v254
    %v277 = vmul.f32 %v37, %v254
    %v278 = vmul.f32 %v38, %v259
    %v279 = vmul.f32 %v39, %v259
    %v280 = vmul.f32 %v40, %v264
    %v281 = vmul.f32 %v41, %v264
    %283 = vset.pattern.permute.xlu0 1
    %284 = vperm.xlu0 %283, %v218
    %v285 = vpop.permute.xlu0 %284
    %288 = vset.pattern.permute.xlu0 1
    %289 = vperm.xlu0 %288, %v219
    %v290 = vpop.permute.xlu0 %289
    %293 = vset.pattern.permute.xlu0 1
    %294 = vperm.xlu0 %293, %v220
    %v295 = vpop.permute.xlu0 %294
    %298 = vset.pattern.permute.xlu0 1
    %299 = vperm.xlu0 %298, %v221
    %v300 = vpop.permute.xlu0 %299
    %303 = vset.pattern.permute.xlu0 1
    %304 = vperm.xlu0 %303, %v222
    %v305 = vpop.permute.xlu0 %304
    %308 = vset.pattern.permute.xlu0 1
    %309 = vperm.xlu0 %308, %v223
    %v310 = vpop.permute.xlu0 %309
    %313 = vset.pattern.permute.xlu0 1
    %314 = vperm.xlu0 %313, %v224
    %v315 = vpop.permute.xlu0 %314
    %318 = vset.pattern.permute.xlu0 1
    %319 = vperm.xlu0 %318, %v225
    %v320 = vpop.permute.xlu0 %319
    %v322 = vadd.f32 %v266, %v285
    %v323 = vadd.f32 %v267, %v285
    %v324 = vadd.f32 %v268, %v290
    %v325 = vadd.f32 %v269, %v290
    %v326 = vadd.f32 %v270, %v295
    %v327 = vadd.f32 %v271, %v295
    %v328 = vadd.f32 %v272, %v300
    %v329 = vadd.f32 %v273, %v300
    %v330 = vadd.f32 %v274, %v305
    %v331 = vadd.f32 %v275, %v305
    %v332 = vadd.f32 %v276, %v310
    %v333 = vadd.f32 %v277, %v310
    %v334 = vadd.f32 %v278, %v315
    %v335 = vadd.f32 %v279, %v315
    %v336 = vadd.f32 %v280, %v320
    %v337 = vadd.f32 %v281, %v320
    %338 = vst [vmem:[#allocation5] sm:$0xff] %v322
    %339 = vst [vmem:[#allocation5 + $0x8] sm:$0xff] %v323
    %340 = vst [vmem:[#allocation5 + $0x10] sm:$0xff] %v324
    %341 = vst [vmem:[#allocation5 + $0x18] sm:$0xff] %v325
    %342 = vst [vmem:[#allocation5 + $0x20] sm:$0xff] %v326
    %343 = vst [vmem:[#allocation5 + $0x28] sm:$0xff] %v327
    %344 = vst [vmem:[#allocation5 + $0x30] sm:$0xff] %v328
    %345 = vst [vmem:[#allocation5 + $0x38] sm:$0xff] %v329
    %346 = vst [vmem:[#allocation5 + $0x40] sm:$0xff] %v330
    %347 = vst [vmem:[#allocation5 + $0x48] sm:$0xff] %v331
    %348 = vst [vmem:[#allocation5 + $0x50] sm:$0xff] %v332
    %349 = vst [vmem:[#allocation5 + $0x58] sm:$0xff] %v333
    %350 = vst [vmem:[#allocation5 + $0x60] sm:$0xff] %v334
    %351 = vst [vmem:[#allocation5 + $0x68] sm:$0xff] %v335
    %352 = vst [vmem:[#allocation5 + $0x70] sm:$0xff] %v336
    %353 = vst [vmem:[#allocation5 + $0x78] sm:$0xff] %v337
    // Predicated region
    $region14: #{tpu_custom_call.1} parent=1 // pred_check
      _
    $region15: #{tpu_custom_call.1} parent=1 // pred_check_branch
      %355 = sbr.rel (0) target = $region17
    $region16: #{tpu_custom_call.1} parent=1 // pred_region
      %s357 = ssub.s32 2048, 2048
      %358 = vsyncadd [#allocation4], %s357
      %s359 = sshll.u32 [#allocation5], 4
      %s360 = int_to_ptr.vmem [resolvable:$true] %s359
      %365 = dma.vmem_to_hbm [thread:$0]  %s360, 2048, %s2, [#allocation4], 256, 256, 16
    $region17: #{tpu_custom_call.1} parent=1 // pred_fallthru
      _
    // Predicated region
    $region18: #{tpu_custom_call.1} parent=1 // pred_check
      _
    $region19: #{tpu_custom_call.1} parent=1 // pred_check_branch
      %367 = sbr.rel (0) target = $region21
    $region20: #{tpu_custom_call.1} parent=1 // pred_region
      %368 = dma.done [#allocation4], 2048
    $region21: #{tpu_custom_call.1} parent=1 // pred_fallthru
      _
    %369 = vsyncpa [#allocation3], 1
    %370 = vsyncpa [#allocation4], 1

</llo_original>
